<compile_context>
chip_gen: v6e
topology: v6e:2x2x1
jax: 0.10.0
libtpu: 0.0.40
codegen_flags: <defaults>
</compile_context>

<pallas_src>
import jax
import jax.numpy as jnp
from jax.experimental import pallas as pl
from jax.experimental.pallas import tpu as pltpu


def _identity_kernel(x_ref, o_ref):
    # Pure copy of one tile; with input/output aliasing this is an in-place
    # rewrite of identical data — no separate output HBM buffer exists.
    o_ref[...] = x_ref[...]


def _choose_2d_layout(shape):
    """Pick a (rows, cols) factorization with no padding and lane-dense cols."""
    total = 1
    for d in shape:
        total *= int(d)
    total = max(total, 1)
    # Prefer wide, 128-aligned lane dims (>=512 lanes turns masked partial
    # stores into full unmasked vst and gets close to the HBM roofline).
    for cols in (4096, 2048, 1024, 512, 256, 128):
        if total % cols == 0:
            return total // cols, cols
    # Ragged fallback: keep the original trailing dim as the lane dim. A block
    # whose last dim equals the full array dim is always legal, so no padding
    # copy is needed.
    if len(shape) >= 2 and int(shape[-1]) > 0:
        return total // int(shape[-1]), int(shape[-1])
    return 1, total


def identity_pallas(x):
    """Identity forward pass: returns x unchanged (same shape, dtype, values)."""
    orig_shape = x.shape
    dtype = x.dtype

    if x.size == 0:
        return x  # nothing to do for empty arrays

    rows, cols = _choose_2d_layout(orig_shape)
    x2d = x.reshape((rows, cols))

    itemsize = jnp.dtype(dtype).itemsize
    # Sublane packing: f32 -> 8 rows, bf16 -> 16, int8/fp8 -> 32.
    sublane = {4: 8, 2: 16, 1: 32}.get(itemsize, 8)

    # Target ~2 MiB per block; bounded VMEM on all generations (v5e/v6e/v7x).
    target_bytes = 2 * 1024 * 1024
    if rows < sublane:
        tile_rows = rows  # full-extent block on the rows dim (always legal)
    else:
        tile_rows = max(1, target_bytes // (cols * itemsize))
        tile_rows = min(tile_rows, rows)
        tile_rows = max(sublane, (tile_rows // sublane) * sublane)

    num_blocks = pl.cdiv(rows, tile_rows)

    out2d = pl.pallas_call(
        _identity_kernel,
        out_shape=jax.ShapeDtypeStruct((rows, cols), dtype),
        grid=(num_blocks,),
        in_specs=[pl.BlockSpec((tile_rows, cols), lambda i: (i, 0))],
        out_specs=pl.BlockSpec((tile_rows, cols), lambda i: (i, 0)),
        # Highest-value change from the perf review: output aliases the input
        # buffer, removing the extra HBM allocation/copy for a pure identity.
        input_output_aliases={0: 0},
        compiler_params=pltpu.CompilerParams(
            dimension_semantics=("parallel",),
        ),
    )(x2d)

    return out2d.reshape(orig_shape)


if __name__ == "__main__":
    key = jax.random.PRNGKey(0)
    # Small NCHW input consistent with a conv-net baseline: batch=2, C=4, 16x16.
    x = jax.random.normal(key, (2, 4, 16, 16), dtype=jnp.float32)
    # Independent copy for verification (the kernel donates/aliases the buffer
    # of its immediate 2D operand).
    expected = jnp.array(x)

    y = identity_pallas(x)
    jax.block_until_ready(y)

    assert y.shape == expected.shape, (y.shape, expected.shape)
    assert y.dtype == expected.dtype, (y.dtype, expected.dtype)
    assert bool(jnp.all(y == expected)), "Identity output mismatch"

    print("KERNEL_OK")
</pallas_src>

<mosaic_0001>
module attributes {stable_mosaic.version = 11 : i64} {
  func.func @_identity_kernel(%arg0: i32, %arg1: memref<1x2048xf32, #tpu.memory_space<vmem>>, %arg2: memref<1x2048xf32, #tpu.memory_space<vmem>>) attributes {dimension_semantics = [#tpu.dimension_semantics<parallel>], iteration_bounds = array<i64: 1>, scalar_prefetch = 0 : i64, scratch_operands = 0 : i64, tpu.core_type = #tpu.core_type<tc>, window_params = [{transform_indices = @transform_0, window_bounds = array<i64: 1, 2048>}, {transform_indices = @transform_1, window_bounds = array<i64: 1, 2048>}]} {
    %c0 = arith.constant 0 : index
    %c0_0 = arith.constant 0 : index
    %0 = vector.load %arg1[%c0, %c0_0] : memref<1x2048xf32, #tpu.memory_space<vmem>>, vector<1x2048xf32>
    %c0_1 = arith.constant 0 : index
    %c0_2 = arith.constant 0 : index
    %1 = vector.load %arg2[%c0_1, %c0_2] : memref<1x2048xf32, #tpu.memory_space<vmem>>, vector<1x2048xf32>
    tpu.vector_store %arg2[%c0_1, %c0_2], %0 {strides = array<i32>} : memref<1x2048xf32, #tpu.memory_space<vmem>>, vector<1x2048xf32>,
    return
  }
  func.func @transform_0(%arg0: i32) -> (i32, i32) {
    %c0_i32 = arith.constant 0 : i32
    %c0_i32_0 = arith.constant 0 : i32
    return %arg0, %c0_i32 : i32, i32
  }
  func.func @transform_1(%arg0: i32) -> (i32, i32) {
    %c0_i32 = arith.constant 0 : i32
    %c0_i32_0 = arith.constant 0 : i32
    return %arg0, %c0_i32 : i32, i32
  }
}

</mosaic_0001>

<llo_original>
// kernel: tpu_custom_call.1
$region0: #{tpu_custom_call.1}
  #allocation0 [shape = 'u32[]', space=smem, size = 0x4, offset = 0x4, fixed_abs, tag = 'smem constant byte address 0x4 - core index']
  #allocation1 [shape = 'u32[144,128]{1,0:T(1,128)}', space=vmem, size = 0x12000, scoped, tag = 'internal scratch']
  %s0 = inlined_call_operand.hbm [shape: f32[1,2048], index: 0, kind: input, shape index: {}, may-alias: {0,1}]
  %s1 = inlined_call_operand.hbm [shape: f32[1,2048], index: 1, kind: output, shape index: {}, may-alias: {0,1}]
  %s2 = sld [smem:[#allocation0]]
  $region18: #{tpu_custom_call.1} parent=0
    _
  %s4 = ssub.s32 1, %s2
  %s5 = scalar_select 0, %s4, %s2
  $region1: #{tpu_custom_call.1} parent=0
    #allocation2 [shape = 'u8[8192]{0}', space=vmem, size = 0x2000, scoped, tag = 'input window, operand 0, single buffered']
    #allocation3 [shape = 's32[1]{0}', space=sflag, size = 0x4, scoped, tag = 'scoped memory for tpu_custom_call.1']
    #allocation4 [shape = 's32[1]{0}', space=sflag, size = 0x4, scoped, tag = 'scoped memory for tpu_custom_call.1']
    #allocation5 [shape = 'u8[8192]{0}', space=vmem, size = 0x2000, scoped, tag = 'output window, operand 0, single buffered']
    %6 = vsyncpa [#allocation3], 0
    %7 = vsyncpa [#allocation4], 0
    // Predicated region
    $region2: #{tpu_custom_call.1} parent=1 // pred_check
      _
    $region3: #{tpu_custom_call.1} parent=1 // pred_check_branch
      %9 = sbr.rel (0) target = $region5
    $region4: #{tpu_custom_call.1} parent=1 // pred_region
      %s11 = ssub.s32 256, 256
      %12 = vsyncadd [#allocation3], %s11
      %s14 = sshll.u32 [#allocation2], 4
      %s15 = int_to_ptr.vmem [resolvable:$true] %s14
      %17 = dma.hbm_to_vmem [thread:$0]  %s0, 256, %s15, [#allocation3]
    $region5: #{tpu_custom_call.1} parent=1 // pred_fallthru
      _
    // Predicated region
    $region6: #{tpu_custom_call.1} parent=1 // pred_check
      _
    $region7: #{tpu_custom_call.1} parent=1 // pred_check_branch
      %19 = sbr.rel (0) target = $region9
    $region8: #{tpu_custom_call.1} parent=1 // pred_region
      %20 = dma.done [#allocation3], 256
    $region9: #{tpu_custom_call.1} parent=1 // pred_fallthru
      _
    %v21 = vld [vmem:[#allocation2] sm:$0xff]
    %v22 = vld [vmem:[#allocation2 + $0x8] sm:$0xff]
    %23 = vst [vmem:[#allocation5] sm:$0xff] %v21
    %24 = vst [vmem:[#allocation5 + $0x8] sm:$0xff] %v22
    // Predicated region
    $region10: #{tpu_custom_call.1} parent=1 // pred_check
      _
    $region11: #{tpu_custom_call.1} parent=1 // pred_check_branch
      %26 = sbr.rel (0) target = $region13
    $region12: #{tpu_custom_call.1} parent=1 // pred_region
      %s28 = ssub.s32 256, 256
      %29 = vsyncadd [#allocation4], %s28
      %s31 = sshll.u32 [#allocation5], 4
      %s32 = int_to_ptr.vmem [resolvable:$true] %s31
      %34 = dma.vmem_to_hbm [thread:$0]  %s32, 256, %s1, [#allocation4]
    $region13: #{tpu_custom_call.1} parent=1 // pred_fallthru
      _
    // Predicated region
    $region14: #{tpu_custom_call.1} parent=1 // pred_check
      _
    $region15: #{tpu_custom_call.1} parent=1 // pred_check_branch
      %36 = sbr.rel (0) target = $region17
    $region16: #{tpu_custom_call.1} parent=1 // pred_region
      %37 = dma.done [#allocation4], 256
    $region17: #{tpu_custom_call.1} parent=1 // pred_fallthru
      _
    %38 = vsyncpa [#allocation3], 1
    %39 = vsyncpa [#allocation4], 1

</llo_original>
